<compile_context>
chip_gen: v7x
topology: tpu7x:2x2x1
jax: 0.10.0
libtpu: 0.0.40
codegen_flags: <defaults>
</compile_context>

<pallas_src>
import jax
import jax.numpy as jnp
from jax.experimental import pallas as pl
from jax.experimental.pallas import tpu as pltpu

LANES = 128
ROW_ALIGN = 32          # int8 sublane tile quantum -> rows padded to mult. of 32
MAX_BLOCK_ROWS = 1024   # (1024,128) f32 block = 512 KiB; fits VMEM on v5e/v6e/v7x


def _bce_classweight_kernel(n_ref, negw_ref, x_ref, y_ref, out_ref):
    """Partial sums of weighted BCE-with-logits, weights derived from labels.

    n_ref    : SMEM (1,) int32   -- true (unpadded) element count
    negw_ref : SMEM (1,) float32 -- weight where label == 0 (positive weight = 1)
    x_ref    : (block_rows, 128) f32 logits block
    y_ref    : (block_rows, 128) int8 label block (0/1)
    out_ref  : (1, 128) f32 per-lane partial sums for this grid block
    """
    i = pl.program_id(0)
    n = n_ref[0]
    neg_w = negw_ref[0]

    x = x_ref[...]
    y = y_ref[...].astype(jnp.float32)
    br = x.shape[0]

    row_ids = jax.lax.broadcasted_iota(jnp.int32, (br, LANES), 0)
    lane_ids = jax.lax.broadcasted_iota(jnp.int32, (br, LANES), 1)
    idx = (i * br + row_ids) * LANES + lane_ids
    valid = idx < n

    x = jnp.where(valid, x, 0.0)
    y = jnp.where(valid, y, 0.0)
    # numerically stable BCE-with-logits (matches torch):
    #   loss = max(x, 0) - x*y + log1p(exp(-|x|))
    loss = jnp.maximum(x, 0.0) - x * y + jnp.log1p(jnp.exp(-jnp.abs(x)))
    w = jnp.where(y > 0.0, 1.0, neg_w)
    contrib = jnp.where(valid, loss * w, 0.0)
    out_ref[...] = jnp.sum(contrib, axis=0, keepdims=True)


def _bce_weighted_kernel(n_ref, x_ref, y_ref, w_ref, out_ref):
    """Same as above but with an arbitrary streamed per-element weight."""
    i = pl.program_id(0)
    n = n_ref[0]

    x = x_ref[...]
    y = y_ref[...].astype(jnp.float32)
    w = w_ref[...]
    br = x.shape[0]

    row_ids = jax.lax.broadcasted_iota(jnp.int32, (br, LANES), 0)
    lane_ids = jax.lax.broadcasted_iota(jnp.int32, (br, LANES), 1)
    idx = (i * br + row_ids) * LANES + lane_ids
    valid = idx < n

    x = jnp.where(valid, x, 0.0)
    y = jnp.where(valid, y, 0.0)
    loss = jnp.maximum(x, 0.0) - x * y + jnp.log1p(jnp.exp(-jnp.abs(x)))
    contrib = jnp.where(valid, loss * w, 0.0)
    out_ref[...] = jnp.sum(contrib, axis=0, keepdims=True)


def _rows_for(n):
    return -(-n // (ROW_ALIGN * LANES)) * ROW_ALIGN


def _to_tiles(v, dtype, rows):
    n = v.shape[0]
    pad = rows * LANES - n
    v = jnp.pad(v.astype(dtype), (0, pad))
    return v.reshape(rows, LANES)


def bce_with_logits_mean_classweight(pred_logits, labels, neg_weight):
    """mean( BCEWithLogits(x, y) * where(y==0, neg_weight, 1) ) — no weight stream."""
    n = pred_logits.shape[0]
    if n == 0:
        return jnp.float32(jnp.nan)  # torch: mean over empty tensor is NaN

    rows = _rows_for(n)
    block_rows = min(MAX_BLOCK_ROWS, rows)
    num_blocks = -(-rows // block_rows)

    x2 = _to_tiles(pred_logits, jnp.float32, rows)
    y2 = _to_tiles(labels, jnp.int8, rows)
    n_arr = jnp.array([n], dtype=jnp.int32)
    negw_arr = jnp.asarray(neg_weight, dtype=jnp.float32).reshape(1)

    partials = pl.pallas_call(
        _bce_classweight_kernel,
        out_shape=jax.ShapeDtypeStruct((num_blocks, LANES), jnp.float32),
        grid_spec=pltpu.PrefetchScalarGridSpec(
            num_scalar_prefetch=2,
            grid=(num_blocks,),
            in_specs=[
                pl.BlockSpec((block_rows, LANES), lambda i, n_s, w_s: (i, 0)),
                pl.BlockSpec((block_rows, LANES), lambda i, n_s, w_s: (i, 0)),
            ],
            out_specs=pl.BlockSpec((1, LANES), lambda i, n_s, w_s: (i, 0)),
        ),
        compiler_params=pltpu.CompilerParams(
            dimension_semantics=("parallel",)),
    )(n_arr, negw_arr, x2, y2)
    return jnp.sum(partials) * jnp.float32(1.0 / n)


def bce_with_logits_mean_weighted(pred_logits, labels, weights):
    """mean( BCEWithLogits(x, y) * weights ) with an arbitrary weight tensor."""
    n = pred_logits.shape[0]
    if n == 0:
        return jnp.float32(jnp.nan)

    rows = _rows_for(n)
    block_rows = min(MAX_BLOCK_ROWS, rows)
    num_blocks = -(-rows // block_rows)

    x2 = _to_tiles(pred_logits, jnp.float32, rows)
    y2 = _to_tiles(labels, jnp.int8, rows)
    w2 = _to_tiles(weights, jnp.float32, rows)
    n_arr = jnp.array([n], dtype=jnp.int32)

    partials = pl.pallas_call(
        _bce_weighted_kernel,
        out_shape=jax.ShapeDtypeStruct((num_blocks, LANES), jnp.float32),
        grid_spec=pltpu.PrefetchScalarGridSpec(
            num_scalar_prefetch=1,
            grid=(num_blocks,),
            in_specs=[
                pl.BlockSpec((block_rows, LANES), lambda i, n_s: (i, 0)),
                pl.BlockSpec((block_rows, LANES), lambda i, n_s: (i, 0)),
                pl.BlockSpec((block_rows, LANES), lambda i, n_s: (i, 0)),
            ],
            out_specs=pl.BlockSpec((1, LANES), lambda i, n_s: (i, 0)),
        ),
        compiler_params=pltpu.CompilerParams(
            dimension_semantics=("parallel",)),
    )(n_arr, x2, y2, w2)
    return jnp.sum(partials) * jnp.float32(1.0 / n)


class ClassificationLoss:
    """JAX/Pallas port of emsim ClassificationLoss (forward = weighted BCE w/ logits)."""

    def __init__(self, no_electron_weight: float,
                 standardize_no_electron_weight: bool = False,
                 weight: float = 1.0):
        self.weight = weight
        self.no_electron_weight = no_electron_weight
        self.standardize_no_electron_weight = standardize_no_electron_weight

    def apply_weight(self, loss_value):
        return self.weight * loss_value

    # Glue (label/weight construction) in plain JAX; hot path (BCE reduction) in Pallas.
    def make_label_and_weight_tensors(self, predicted_dict, matched_indices):
        pred_logits = predicted_dict["pred_logits"]
        query_batch_offsets = predicted_dict["query_batch_offsets"]
        labels = jnp.zeros(pred_logits.shape, dtype=jnp.int32)
        for batch, indices in enumerate(matched_indices):
            labels = labels.at[indices + query_batch_offsets[batch]].set(1)
        if self.standardize_no_electron_weight:
            num_pos = labels.sum().astype(jnp.float32)
            # TODO(synk): inf/NaN if every query is matched (same as torch reference)
            neg_w = num_pos / (labels.size - num_pos)
            weights = jnp.where(labels == 0, neg_w,
                                jnp.float32(1.0)).astype(jnp.float32)
        elif self.no_electron_weight != 1.0:
            weights = jnp.where(labels == 0,
                                jnp.float32(self.no_electron_weight),
                                jnp.float32(1.0))
        else:
            weights = None
        return labels, weights

    def __call__(self, predicted_dict, labels, weights=None):
        pred_logits = predicted_dict["pred_logits"]
        if weights is not None:
            # General path: arbitrary per-element weight tensor is streamed.
            return bce_with_logits_mean_weighted(pred_logits, labels, weights)
        # Fast path: class weight is a scalar function of the label, so derive it
        # in-kernel from an SMEM scalar instead of streaming a full f32 tensor.
        if self.standardize_no_electron_weight:
            num_pos = labels.sum().astype(jnp.float32)
            neg_w = num_pos / (labels.size - num_pos)
        elif self.no_electron_weight != 1.0:
            neg_w = jnp.float32(self.no_electron_weight)
        else:
            neg_w = jnp.float32(1.0)
        return bce_with_logits_mean_classweight(pred_logits, labels, neg_w)


if __name__ == "__main__":
    key = jax.random.PRNGKey(0)
    k_logits, _ = jax.random.split(key)

    # batch=2, 100 queries per image -> 200 total concatenated queries
    num_queries_per_image = 100
    batch = 2
    total_queries = batch * num_queries_per_image

    pred_logits = jax.random.normal(k_logits, (total_queries,), dtype=jnp.float32)
    query_batch_offsets = jnp.array([0, num_queries_per_image], dtype=jnp.int32)
    predicted_dict = {
        "pred_logits": pred_logits,
        "query_batch_offsets": query_batch_offsets,
    }
    # deterministic "matched" indices per batch element
    matched_indices = [
        jnp.array([3, 7, 15, 42, 63], dtype=jnp.int32),
        jnp.array([0, 11, 29, 77, 99], dtype=jnp.int32),
    ]

    loss_mod = ClassificationLoss(no_electron_weight=0.5,
                                  standardize_no_electron_weight=False,
                                  weight=1.0)
    labels, weights = loss_mod.make_label_and_weight_tensors(
        predicted_dict, matched_indices)

    # Fast path (no weight stream; neg class weight as SMEM scalar)
    loss_fast = loss_mod(predicted_dict, labels)
    # General path (explicit weight tensor, torch-parity call signature)
    loss_weighted = loss_mod(predicted_dict, labels, weights)
    loss_fast = jax.block_until_ready(loss_fast)
    loss_weighted = jax.block_until_ready(loss_weighted)

    # pure-JAX reference (same stable BCE formulation, mean reduction)
    x = pred_logits.astype(jnp.float32)
    y = labels.astype(jnp.float32)
    w = weights.astype(jnp.float32)
    ref = jnp.mean(
        (jnp.maximum(x, 0.0) - x * y + jnp.log1p(jnp.exp(-jnp.abs(x)))) * w)

    assert jnp.allclose(loss_fast, ref, rtol=1e-5, atol=1e-6), (loss_fast, ref)
    assert jnp.allclose(loss_weighted, ref, rtol=1e-5, atol=1e-6), (loss_weighted, ref)

    print("KERNEL_OK")
</pallas_src>

<mosaic_0001>
module attributes {stable_mosaic.version = 11 : i64} {
  func.func @_bce_classweight_kernel(%arg0: i32, %arg1: memref<1xi32, #tpu.memory_space<smem>>, %arg2: memref<1xf32, #tpu.memory_space<smem>>, %arg3: memref<32x128xf32, #tpu.memory_space<vmem>>, %arg4: memref<32x128xi8, #tpu.memory_space<vmem>>, %arg5: memref<1x128xf32, #tpu.memory_space<vmem>>) attributes {dimension_semantics = [#tpu.dimension_semantics<parallel>], iteration_bounds = array<i64: 1>, scalar_prefetch = 2 : i64, scratch_operands = 0 : i64, tpu.core_type = #tpu.core_type<tc>, window_params = [{transform_indices = @transform_0, window_bounds = array<i64: 32, 128>}, {transform_indices = @transform_1, window_bounds = array<i64: 32, 128>}, {transform_indices = @transform_2, window_bounds = array<i64: 1, 128>}]} {
    %c0 = arith.constant 0 : index
    %0 = memref.load %arg1[%c0] : memref<1xi32, #tpu.memory_space<smem>>
    %c0_0 = arith.constant 0 : index
    %1 = memref.load %arg2[%c0_0] : memref<1xf32, #tpu.memory_space<smem>>
    %c0_1 = arith.constant 0 : index
    %c0_2 = arith.constant 0 : index
    %2 = vector.load %arg3[%c0_1, %c0_2] : memref<32x128xf32, #tpu.memory_space<vmem>>, vector<32x128xf32>
    %c0_3 = arith.constant 0 : index
    %c0_4 = arith.constant 0 : index
    %3 = vector.load %arg4[%c0_3, %c0_4] : memref<32x128xi8, #tpu.memory_space<vmem>>, vector<32x128xi8>
    %4 = arith.sitofp %3 : vector<32x128xi8> to vector<32x128xf32>
    %5 = tpu.iota {dimensions = array<i32: 0>} : vector<32x128xi32>
    %6 = tpu.iota {dimensions = array<i32: 1>} : vector<32x128xi32>
    %c32_i32 = arith.constant 32 : i32
    %7 = arith.muli %arg0, %c32_i32 : i32
    %8 = vector.broadcast %7 : i32 to vector<32x128xi32>
    %9 = arith.addi %8, %5 : vector<32x128xi32>
    %c128_i32 = arith.constant 128 : i32
    %10 = vector.broadcast %c128_i32 : i32 to vector<32x128xi32>
    %11 = arith.muli %9, %10 : vector<32x128xi32>
    %12 = arith.addi %11, %6 : vector<32x128xi32>
    %13 = vector.broadcast %0 : i32 to vector<32x128xi32>
    %14 = arith.cmpi slt, %12, %13 : vector<32x128xi32>
    %cst = arith.constant 0.000000e+00 : f32
    %15 = vector.broadcast %cst : f32 to vector<32x128xf32>
    %16 = arith.select %14, %2, %15 : vector<32x128xi1>, vector<32x128xf32>
    %cst_5 = arith.constant 0.000000e+00 : f32
    %17 = vector.broadcast %cst_5 : f32 to vector<32x128xf32>
    %18 = arith.select %14, %4, %17 : vector<32x128xi1>, vector<32x128xf32>
    %cst_6 = arith.constant 0.000000e+00 : f32
    %19 = vector.broadcast %cst_6 : f32 to vector<32x128xf32>
    %20 = arith.maximumf %16, %19 : vector<32x128xf32>
    %21 = arith.mulf %16, %18 : vector<32x128xf32>
    %22 = arith.subf %20, %21 : vector<32x128xf32>
    %23 = math.absf %16 : vector<32x128xf32>
    %cst_7 = arith.constant 0.000000e+00 : f32
    %24 = vector.broadcast %cst_7 : f32 to vector<32x128xf32>
    %25 = arith.subf %24, %23 : vector<32x128xf32>
    %26 = math.exp %25 : vector<32x128xf32>
    %27 = math.log1p %26 : vector<32x128xf32>
    %28 = arith.addf %22, %27 : vector<32x128xf32>
    %cst_8 = arith.constant 0.000000e+00 : f32
    %29 = vector.broadcast %cst_8 : f32 to vector<32x128xf32>
    %30 = arith.cmpf ogt, %18, %29 : vector<32x128xf32>
    %cst_9 = arith.constant 1.000000e+00 : f32
    %31 = vector.broadcast %cst_9 : f32 to vector<32x128xf32>
    %32 = vector.broadcast %1 : f32 to vector<32x128xf32>
    %33 = arith.select %30, %31, %32 : vector<32x128xi1>, vector<32x128xf32>
    %34 = arith.mulf %28, %33 : vector<32x128xf32>
    %cst_10 = arith.constant 0.000000e+00 : f32
    %35 = vector.broadcast %cst_10 : f32 to vector<32x128xf32>
    %36 = arith.select %14, %34, %35 : vector<32x128xi1>, vector<32x128xf32>
    %cst_11 = arith.constant dense<0.000000e+00> : vector<128xf32>
    %37 = vector.multi_reduction <add>, %36, %cst_11 [0] : vector<32x128xf32> to vector<128xf32>
    %38 = vector.shape_cast %37 : vector<128xf32> to vector<1x128xf32>
    %c0_12 = arith.constant 0 : index
    %c0_13 = arith.constant 0 : index
    %39 = vector.load %arg5[%c0_12, %c0_13] : memref<1x128xf32, #tpu.memory_space<vmem>>, vector<1x128xf32>
    tpu.vector_store %arg5[%c0_12, %c0_13], %38 {strides = array<i32>} : memref<1x128xf32, #tpu.memory_space<vmem>>, vector<1x128xf32>,
    return
  }
  func.func @transform_0(%arg0: i32, %arg1: memref<1xi32, #tpu.memory_space<smem>>, %arg2: memref<1xf32, #tpu.memory_space<smem>>) -> (i32, i32) {
    %c0_i32 = arith.constant 0 : i32
    %c0_i32_0 = arith.constant 0 : i32
    return %arg0, %c0_i32 : i32, i32
  }
  func.func @transform_1(%arg0: i32, %arg1: memref<1xi32, #tpu.memory_space<smem>>, %arg2: memref<1xf32, #tpu.memory_space<smem>>) -> (i32, i32) {
    %c0_i32 = arith.constant 0 : i32
    %c0_i32_0 = arith.constant 0 : i32
    return %arg0, %c0_i32 : i32, i32
  }
  func.func @transform_2(%arg0: i32, %arg1: memref<1xi32, #tpu.memory_space<smem>>, %arg2: memref<1xf32, #tpu.memory_space<smem>>) -> (i32, i32) {
    %c0_i32 = arith.constant 0 : i32
    %c0_i32_0 = arith.constant 0 : i32
    return %arg0, %c0_i32 : i32, i32
  }
}

</mosaic_0001>

<llo_original>
// kernel: tpu_custom_call.1
$region0: #{tpu_custom_call.1}
  #allocation0 [shape = 'u32[]', space=smem, size = 0x4, offset = 0x4, fixed_abs, tag = 'smem constant byte address 0x4 - core index']
  #allocation1 [shape = 'u32[144,128]{1,0:T(1,128)}', space=vmem, size = 0x12000, scoped, tag = 'internal scratch']
  #allocation2 [shape = 's32[1]{0}', space=sflag, size = 0x4, scoped, tag = 'scoped memory for tpu_custom_call.1']
  #allocation3 [shape = 's32[1]{0:T(128)S(6)}', space=smem, size = 0x200, scoped, tag = 'prefetched SMEM operand 0']
  #allocation4 [shape = 'f32[1]{0:T(128)S(6)}', space=smem, size = 0x200, scoped, tag = 'prefetched SMEM operand 1']
  %s0 = inlined_call_operand.<no memory space> [shape: s32[1], index: 0, kind: input, shape index: {}]
  %s1 = inlined_call_operand.<no memory space> [shape: f32[1], index: 1, kind: input, shape index: {}]
  %s2 = inlined_call_operand.hbm [shape: f32[32,128], index: 2, kind: input, shape index: {}]
  %s3 = inlined_call_operand.vmem [shape: s8[32,128], index: 3, kind: input, shape index: {}]
  %s4 = inlined_call_operand.hbm [shape: f32[1,128], index: 4, kind: output, shape index: {}]
  %s5 = sld [smem:[#allocation0]]
  $region22: #{tpu_custom_call.1} parent=0
    _
  %s7 = ssub.s32 1, %s5
  %s8 = scalar_select 0, %s7, %s5
  %9 = sst [smem:[#allocation3]] %s0
  %10 = sst [smem:[#allocation4]] %s1
  $region1: #{tpu_custom_call.1} parent=0
    #allocation5 [shape = 'u8[16384]{0}', space=vmem, size = 0x4000, scoped, tag = 'input window, operand 2, single buffered']
    #allocation6 [shape = 's32[1]{0}', space=sflag, size = 0x4, scoped, tag = 'scoped memory for tpu_custom_call.1']
    #allocation7 [shape = 's32[1]{0}', space=sflag, size = 0x4, scoped, tag = 'scoped memory for tpu_custom_call.1']
    #allocation8 [shape = 'u8[512]{0}', space=vmem, size = 0x400, scoped, tag = 'output window, operand 0, single buffered']
    %11 = vsyncpa [#allocation6], 0
    %12 = vsyncpa [#allocation7], 0
    // Predicated region
    $region2: #{tpu_custom_call.1} parent=1 // pred_check
      _
    $region3: #{tpu_custom_call.1} parent=1 // pred_check_branch
      %14 = sbr.rel (0) target = $region5
    $region4: #{tpu_custom_call.1} parent=1 // pred_region
      %s16 = ssub.s32 512, 512
      %17 = vsyncadd [#allocation6], %s16
      %s18 = sshll.u32 [#allocation5], 4
      %s19 = int_to_ptr.vmem [resolvable:$true] %s18
      %24 = dma.hbm_to_vmem [thread:$0]  %s2, 512, %s19, [#allocation6], 128, 128, 8
    $region5: #{tpu_custom_call.1} parent=1 // pred_fallthru
      _
    // Predicated region
    $region6: #{tpu_custom_call.1} parent=1 // pred_check
      _
    $region7: #{tpu_custom_call.1} parent=1 // pred_check_branch
      %26 = sbr.rel (0) target = $region9
    $region8: #{tpu_custom_call.1} parent=1 // pred_region
      _
    $region9: #{tpu_custom_call.1} parent=1 // pred_fallthru
      _
    // Predicated region
    $region10: #{tpu_custom_call.1} parent=1 // pred_check
      _
    $region11: #{tpu_custom_call.1} parent=1 // pred_check_branch
      %28 = sbr.rel (0) target = $region13
    $region12: #{tpu_custom_call.1} parent=1 // pred_region
      %29 = dma.done [#allocation6], 512
    $region13: #{tpu_custom_call.1} parent=1 // pred_fallthru
      _
    %s30 = sld [smem:[#allocation3]]
    %s31 = sld [smem:[#allocation4]]
    %v32 = vld [vmem:[#allocation5] sm:$0xff]
    %v33 = vld [vmem:[#allocation5 + $0x8] sm:$0xff]
    %v34 = vld [vmem:[#allocation5 + $0x10] sm:$0xff]
    %v35 = vld [vmem:[#allocation5 + $0x18] sm:$0xff]
    %v36 = vld [vmem:[%s3] sm:$0xff]
    %v37 = vunpack.c.0.s8 %v36
    %v38 = vunpack.c.1.s8 %v36
    %v39 = vunpack.c.2.s8 %v36
    %v40 = vunpack.c.3.s8 %v36
    %v41 = vcvt.s32.f32 %v37
    %v42 = vcvt.s32.f32 %v38
    %v43 = vcvt.s32.f32 %v39
    %v44 = vcvt.s32.f32 %v40
    %v45 = vlaneseq
    %v46 = vshrl.u32 %v45, 7
    %v47 = vadd.s32 %v46, 8
    %v48 = vadd.s32 %v46, 16
    %v49 = vadd.s32 %v46, 24
    %v50 = vlaneseq
    %v51 = vand.u32 %v50, 127
    %s52 = smul.u32 0, 32
    %v53 = vstv %s52
    %v54 = vadd.s32 %v53, %v46
    %v55 = vadd.s32 %v53, %v47
    %v56 = vadd.s32 %v53, %v48
    %v57 = vadd.s32 %v53, %v49
    %v58 = vmul.u32 %v54, 128
    %v59 = vmul.u32 %v55, 128
    %v60 = vmul.u32 %v56, 128
    %v61 = vmul.u32 %v57, 128
    %v62 = vadd.s32 %v58, %v51
    %v63 = vadd.s32 %v59, %v51
    %v64 = vadd.s32 %v60, %v51
    %v65 = vadd.s32 %v61, %v51
    %v66 = vstv %s30
    %vm67 = vcmp.lt.s32.totalorder %v62, %v66
    %vm68 = vcmp.lt.s32.totalorder %v63, %v66
    %vm69 = vcmp.lt.s32.totalorder %v64, %v66
    %vm70 = vcmp.lt.s32.totalorder %v65, %v66
    %v71 = vsel %vm67, %v32, 0.0
    %v72 = vsel %vm68, %v33, 0.0
    %v73 = vsel %vm69, %v34, 0.0
    %v74 = vsel %vm70, %v35, 0.0
    %v75 = vsel %vm67, %v41, 0.0
    %v76 = vsel %vm68, %v42, 0.0
    %v77 = vsel %vm69, %v43, 0.0
    %v78 = vsel %vm70, %v44, 0.0
    %v79 = vmax.f32 %v71, 0.0
    %v80 = vmax.f32 %v72, 0.0
    %v81 = vmax.f32 %v73, 0.0
    %v82 = vmax.f32 %v74, 0.0
    %v83 = vmul.f32 %v71, %v75
    %v84 = vmul.f32 %v72, %v76
    %v85 = vmul.f32 %v73, %v77
    %v86 = vmul.f32 %v74, %v78
    %v87 = vsub.f32 %v79, %v83
    %v88 = vsub.f32 %v80, %v84
    %v89 = vsub.f32 %v81, %v85
    %v90 = vsub.f32 %v82, %v86
    %v91 = vand.u32 2147483647, %v71
    %v92 = vand.u32 2147483647, %v72
    %v93 = vand.u32 2147483647, %v73
    %v94 = vand.u32 2147483647, %v74
    %v95 = vsub.f32 0.0, %v91
    %v96 = vsub.f32 0.0, %v92
    %v97 = vsub.f32 0.0, %v93
    %v98 = vsub.f32 0.0, %v94
    %v99 = vmul.f32 %v95, 1.442695
    %v100 = vpow.pop %v99
    %v101 = vmul.f32 %v96, 1.442695
    %v102 = vpow.pop %v101
    %v103 = vmul.f32 %v97, 1.442695
    %v104 = vpow.pop %v103
    %v105 = vmul.f32 %v98, 1.442695
    %v106 = vpow.pop %v105
    %v107 = vadd.f32 %v100, 1.0
    %v108 = vlog2.pop %v107
    %v109 = vmul.f32 %v108, 0.6931472
    %v110 = vmul.f32 -0.5, %v100
    %v111 = vadd.f32 %v110, 1.0
    %v112 = vmul.f32 %v111, %v100
    %v113 = vand.u32 2147483647, %v100
    %vm114 = vcmp.lt.f32.partialorder %v113, 0.0004427343
    %v115 = vsel %vm114, %v112, %v109
    %v116 = vadd.f32 %v102, 1.0
    %v117 = vlog2.pop %v116
    %v118 = vmul.f32 %v117, 0.6931472
    %v119 = vmul.f32 -0.5, %v102
    %v120 = vadd.f32 %v119, 1.0
    %v121 = vmul.f32 %v120, %v102
    %v122 = vand.u32 2147483647, %v102
    %vm123 = vcmp.lt.f32.partialorder %v122, 0.0004427343
    %v124 = vsel %vm123, %v121, %v118
    %v125 = vadd.f32 %v104, 1.0
    %v126 = vlog2.pop %v125
    %v127 = vmul.f32 %v126, 0.6931472
    %v128 = vmul.f32 -0.5, %v104
    %v129 = vadd.f32 %v128, 1.0
    %v130 = vmul.f32 %v129, %v104
    %v131 = vand.u32 2147483647, %v104
    %vm132 = vcmp.lt.f32.partialorder %v131, 0.0004427343
    %v133 = vsel %vm132, %v130, %v127
    %v134 = vadd.f32 %v106, 1.0
    %v135 = vlog2.pop %v134
    %v136 = vmul.f32 %v135, 0.6931472
    %v137 = vmul.f32 -0.5, %v106
    %v138 = vadd.f32 %v137, 1.0
    %v139 = vmul.f32 %v138, %v106
    %v140 = vand.u32 2147483647, %v106
    %vm141 = vcmp.lt.f32.partialorder %v140, 0.0004427343
    %v142 = vsel %vm141, %v139, %v136
    %v143 = vadd.f32 %v87, %v115
    %v144 = vadd.f32 %v88, %v124
    %v145 = vadd.f32 %v89, %v133
    %v146 = vadd.f32 %v90, %v142
    %vm147 = vcmp.gt.f32.partialorder %v75, 0.0
    %vm148 = vcmp.gt.f32.partialorder %v76, 0.0
    %vm149 = vcmp.gt.f32.partialorder %v77, 0.0
    %vm150 = vcmp.gt.f32.partialorder %v78, 0.0
    %v151 = vstv %s31
    %v152 = vsel %vm147, 1.0, %v151
    %v153 = vsel %vm148, 1.0, %v151
    %v154 = vsel %vm149, 1.0, %v151
    %v155 = vsel %vm150, 1.0, %v151
    %v156 = vmul.f32 %v143, %v152
    %v157 = vmul.f32 %v144, %v153
    %v158 = vmul.f32 %v145, %v154
    %v159 = vmul.f32 %v146, %v155
    %v160 = vsel %vm67, %v156, 0.0
    %v161 = vsel %vm68, %v157, 0.0
    %v162 = vsel %vm69, %v158, 0.0
    %v163 = vsel %vm70, %v159, 0.0
    %v164 = vadd.f32 %v160, %v161
    %v165 = vadd.f32 %v164, %v162
    %v166 = vadd.f32 %v165, %v163
    %v167 = vrot.slane %v166, 4
    %v168 = vadd.f32 %v166, %v167
    %v169 = vrot.slane %v168, 2
    %v170 = vadd.f32 %v168, %v169
    %v171 = vrot.slane %v170, 1
    %v172 = vadd.f32 %v170, %v171
    %173 = vst [vmem:[#allocation8] sm:$0x1] %v172
    // Predicated region
    $region14: #{tpu_custom_call.1} parent=1 // pred_check
      _
    $region15: #{tpu_custom_call.1} parent=1 // pred_check_branch
      %175 = sbr.rel (0) target = $region17
    $region16: #{tpu_custom_call.1} parent=1 // pred_region
      %s177 = ssub.s32 16, 16
      %178 = vsyncadd [#allocation7], %s177
      %s180 = sshll.u32 [#allocation8], 4
      %s181 = int_to_ptr.vmem [resolvable:$true] %s180
      %183 = dma.vmem_to_hbm [thread:$0]  %s181, 16, %s4, [#allocation7]
    $region17: #{tpu_custom_call.1} parent=1 // pred_fallthru
      _
    // Predicated region
    $region18: #{tpu_custom_call.1} parent=1 // pred_check
      _
    $region19: #{tpu_custom_call.1} parent=1 // pred_check_branch
      %185 = sbr.rel (0) target = $region21
    $region20: #{tpu_custom_call.1} parent=1 // pred_region
      %186 = dma.done [#allocation7], 16
    $region21: #{tpu_custom_call.1} parent=1 // pred_fallthru
      _
    %187 = vsyncpa [#allocation6], 1
    %188 = vsyncpa [#allocation7], 1

</llo_original>
